<compile_context>
chip_gen: v6e
topology: v6e:2x2x1
jax: 0.10.0
libtpu: 0.0.40
codegen_flags: <defaults>
</compile_context>

<pallas_src>
import jax
import jax.numpy as jnp
from jax.experimental import pallas as pl
from jax.experimental.pallas import tpu as pltpu


def _dma_copy_kernel(x_ref, o_ref, sem):
    # x_ref / o_ref are raw HBM refs (memory_space=pl.ANY).
    # One large HBM->HBM DMA; no VMEM staging, no (8,128) layout constraints.
    cp = pltpu.make_async_copy(x_ref, o_ref, sem)
    cp.start()
    cp.wait()


def _materializing_copy(x2d: jax.Array) -> jax.Array:
    n, f = x2d.shape
    itemsize = jnp.dtype(x2d.dtype).itemsize
    return pl.pallas_call(
        _dma_copy_kernel,
        out_shape=jax.ShapeDtypeStruct((n, f), x2d.dtype),
        in_specs=[pl.BlockSpec(memory_space=pl.ANY)],
        out_specs=pl.BlockSpec(memory_space=pl.ANY),
        scratch_shapes=[pltpu.SemaphoreType.DMA(())],
        cost_estimate=pl.CostEstimate(
            flops=0,
            transcendentals=0,
            bytes_accessed=2 * n * f * itemsize,
        ),
    )(x2d)


def flatten(x: jax.Array, *, materialize: bool = False) -> jax.Array:
    """Equivalent of torch.nn.Flatten(): (N, d1, d2, ...) -> (N, d1*d2*...).

    By default this is the metadata-only reshape (free; no kernel, no HBM
    traffic).  Pass materialize=True to force an explicit HBM->HBM copy via
    a Pallas DMA kernel (useful only when a materialized buffer / kernel
    boundary is explicitly required).
    """
    n = x.shape[0]
    f = 1
    for d in x.shape[1:]:
        f *= d

    # Metadata-only contiguous collapse; this alone already *is* nn.Flatten.
    x2d = x.reshape(n, f)

    if not materialize:
        return x2d

    return _materializing_copy(x2d)


if __name__ == "__main__":
    key = jax.random.PRNGKey(0)
    # Small NCHW input consistent with a typical conv feature map.
    x = jax.random.normal(key, (2, 4, 16, 16), dtype=jnp.float32)

    # Reference: plain reshape (what nn.Flatten does).
    y_ref = x.reshape(x.shape[0], -1)

    # Default (recommended) path: metadata-only reshape.
    y = flatten(x)
    y = jax.block_until_ready(y)
    assert y.shape == (2, 4 * 16 * 16), y.shape
    assert y.dtype == x.dtype
    assert bool(jnp.array_equal(y, y_ref)), "mismatch vs reference (reshape path)"

    # Opt-in materializing path: single HBM->HBM DMA Pallas kernel.
    y_mat = flatten(x, materialize=True)
    y_mat = jax.block_until_ready(y_mat)
    assert y_mat.shape == (2, 4 * 16 * 16), y_mat.shape
    assert y_mat.dtype == x.dtype
    assert bool(jnp.array_equal(y_mat, y_ref)), "mismatch vs reference (DMA path)"

    print("KERNEL_OK")
</pallas_src>

<mosaic_0001>
module attributes {stable_mosaic.version = 11 : i64} {
  func.func @_dma_copy_kernel(%arg0: memref<2x1024xf32, #tpu.memory_space<any>>, %arg1: memref<2x1024xf32, #tpu.memory_space<any>>, %arg2: memref<!tpu.dma_semaphore, #tpu.memory_space<semaphore_mem>>) attributes {dimension_semantics = [], scalar_prefetch = 0 : i64, scratch_operands = 1 : i64, tpu.core_type = #tpu.core_type<tc>} {
    tpu.enqueue_dma source(%arg0 : memref<2x1024xf32, #tpu.memory_space<any>>) target(%arg1 : memref<2x1024xf32, #tpu.memory_space<any>>) target_semaphore(%arg2 : memref<!tpu.dma_semaphore, #tpu.memory_space<semaphore_mem>>)
    tpu.wait_dma2 semaphore(%arg2 : memref<!tpu.dma_semaphore, #tpu.memory_space<semaphore_mem>>) src(%arg0 : memref<2x1024xf32, #tpu.memory_space<any>>) dst(%arg1 : memref<2x1024xf32, #tpu.memory_space<any>>)
    return
  }
}

</mosaic_0001>

<llo_original>
// kernel: tpu_custom_call.1
$region0: #{tpu_custom_call.1}
  #allocation0 [shape = 'u32[]', space=smem, size = 0x4, offset = 0x4, fixed_abs, tag = 'smem constant byte address 0x4 - core index']
  #allocation1 [shape = 'u32[144,128]{1,0:T(1,128)}', space=vmem, size = 0x12000, scoped, tag = 'internal scratch']
  #allocation2 [shape = 's32[1]{0}', space=sflag, size = 0x4, scoped, tag = 'scratch operand']
  #allocation3 [shape = 's32[]', space=sflag, size = 0x4, offset = 0, fixed_abs, tag = 'sflag constant byte address 0x0 - dummy sync flag']
  #allocation4 [shape = 'u32[0]{0}', space=smem, size = 0, offset = 0, fixed_abs, tag = 'smem constant byte address 0x0 - null']
  %s0 = inlined_call_operand.hbm [shape: f32[2,1024], index: 0, kind: input, shape index: {}]
  %s1 = inlined_call_operand.hbm [shape: f32[2,1024], index: 1, kind: output, shape index: {}]
  %s2 = sld [smem:[#allocation0]]
  $region2: #{tpu_custom_call.1} parent=0
    _
  %s4 = ssub.s32 1, %s2
  %s5 = scalar_select 0, %s4, %s2
  %s7 = sshll.u32 1, 14
  %s8 = sxor.u32 4294967295, %s7
  %12 = dma.general %s0, 256, %s1, [#allocation2], 131072, [#allocation4], 0, 0
  %s13 = smul.u32 2, 1
  %s14 = smul.u32 %s13, 8
  %s15 = sshll.u32 %s14, 4
  %16 = dma.done [#allocation2], %s15
  %17 = vsyncmov [#allocation2]
  %s18 = vpop.sfrf %17
  %p19 = scmp.eq.s32.totalorder %s18, 0
  %p20 = pneg %p19
  %22 = shalt.err (%p20)

</llo_original>
